<compile_context>
chip_gen: v6e
topology: v6e:2x2x1
jax: 0.10.0
libtpu: 0.0.40
codegen_flags: <defaults>
</compile_context>

<pallas_src>
import functools

import jax
import jax.numpy as jnp
from jax.experimental import pallas as pl
from jax.experimental.pallas import tpu as pltpu


def _residue_kernel(x_ref, w1_ref, c1_ref, w2_ref, c2_ref, o_ref, *, mxu_dtype):
    # x_ref / o_ref: (1, C, TL)   -- one batch element, channels x positions
    # w*_ref:        (C, C)       -- BN scale already folded in
    # c*_ref:        (C, 1)       -- folded conv bias + BN shift
    x = x_ref[0]                                               # (C, TL)
    x_f32 = x.astype(jnp.float32)
    # TODO(synk): for tiny channel counts (C < 8) an unrolled VPU multiply-add
    # (or padding C to the sublane width) would beat this under-utilized MXU
    # matmul; low priority since that regime is HBM/step-overhead bound.
    h = jnp.dot(w1_ref[...], x.astype(mxu_dtype),
                preferred_element_type=jnp.float32)            # Conv1 (+BN1 scale)
    h = jnp.maximum(h + c1_ref[...], 0.0)                      # bias/shift + ReLU
    h = jnp.dot(w2_ref[...], h.astype(mxu_dtype),
                preferred_element_type=jnp.float32)            # Conv2 (+BN2 scale)
    h = jnp.maximum(h + c2_ref[...], 0.0)                      # bias/shift + ReLU
    o_ref[0] = (x_f32 + h).astype(o_ref.dtype)                 # residual add


def _vmem_capacity_bytes(default=64 * 1024 * 1024):
    """Per-core VMEM capacity; conservative 64 MiB fallback (v7x-safe)."""
    try:
        cap = getattr(pltpu.get_tpu_info(), "vmem_capacity_bytes", None)
        return int(cap) if cap else default
    except Exception:
        return default


def _round_down_128(v):
    return max((v // 128) * 128, 128)


def _round_up_128(v):
    return max(-(-v // 128) * 128, 128)


def _pick_tile_l(C, L, N, *, budget_bytes, act_bytes, w_bytes):
    """Lane-axis tile (positions per grid step), sized against the VMEM budget.

    Resident: two single-buffered (C, C) weights, two (C, 1) bias columns
    (padded to 128 lanes).  Per lane column: x and out (double-buffered, in the
    streamed dtype), one f32 intermediate, plus bf16 operand copies if the MXU
    path is bf16.  No arbitrary cap: the kernel is HBM-bound (C/2 FLOP/byte),
    so bigger tiles = fewer grid steps = less fixed per-step overhead.
    """
    weight_bytes = 2 * C * C * w_bytes                 # single-buffered constants
    bias_bytes = 2 * C * 128 * 4                       # (C,1) pads to 128 lanes
    per_col = 2 * 2 * C * act_bytes + C * 4            # x/out double-buffered + f32 h
    if act_bytes != 4 or w_bytes != 4:
        per_col += 2 * C * 2                           # in-kernel bf16 operand copies
    avail = max(budget_bytes - weight_bytes - bias_bytes, per_col * 128)
    tile = _round_down_128(avail // per_col)
    if N == 1:
        # Keep >= 2 grid blocks so both v7x TensorCores get work.
        tile = min(tile, _round_up_128((L + 1) // 2))
    return int(L) if L <= tile else int(tile)


def residue_module_forward(x_ncl, params, *, eps=1e-5, mxu_dtype=None,
                           stream_dtype=None):
    """x_ncl: (N, C, L), PyTorch NCL convention.  Eval-mode BatchNorm.

    mxu_dtype: None -> auto (bf16 once C is large enough to be MXU-bound on
      any generation, incl. v5e; exact f32 matmuls otherwise).
    stream_dtype: optional activation-streaming dtype for x / out
      (e.g. jnp.bfloat16 halves HBM traffic); elementwise math stays f32.
    """
    N, C, L = x_ncl.shape
    w1, b1, g1, be1, rm1, rv1, w2, b2, g2, be2, rm2, rv2 = params

    if mxu_dtype is None:
        mxu_dtype = jnp.bfloat16 if C >= 512 else jnp.float32

    if stream_dtype is not None and x_ncl.dtype != stream_dtype:
        x_ncl = x_ncl.astype(stream_dtype)   # prefer casting upstream of the call
    act_dtype = x_ncl.dtype

    # Fold eval-mode BN into the conv weights / biases (once, at trace time).
    s1 = g1 / jnp.sqrt(rv1 + eps)
    s2 = g2 / jnp.sqrt(rv2 + eps)
    w1f = (w1 * s1[:, None]).astype(mxu_dtype)              # (C_out, C_in)
    w2f = (w2 * s2[:, None]).astype(mxu_dtype)
    c1 = (s1 * (b1 - rm1) + be1).reshape(C, 1).astype(jnp.float32)
    c2 = (s2 * (b2 - rm2) + be2).reshape(C, 1).astype(jnp.float32)

    # Generation-aware, consistent VMEM budgeting (v7x 64 MiB, v5e/v6e 128 MiB).
    vmem_cap = _vmem_capacity_bytes()
    vmem_limit = int(vmem_cap * 0.85)       # headroom for Mosaic internal scratch
    tile_budget = int(vmem_cap * 0.72)

    act_bytes = jnp.dtype(act_dtype).itemsize
    w_bytes = jnp.dtype(mxu_dtype).itemsize
    tile_l = _pick_tile_l(C, L, N, budget_bytes=tile_budget,
                          act_bytes=act_bytes, w_bytes=w_bytes)
    # No wrapper pad/slice: ragged last tile handled by Pallas block clipping
    # (OOB lanes never contaminate valid lanes -- all ops are lane-independent --
    #  and OOB writes are dropped on writeback).
    n_l = pl.cdiv(L, tile_l)

    x_spec = pl.BlockSpec((1, C, tile_l), lambda n, l: (n, 0, l))

    def _const_spec(shape):
        idx = lambda n, l: (0, 0)
        try:
            # Constant block index -> single-buffer to free VMEM for bigger tiles.
            return pl.BlockSpec(shape, idx, pipeline_mode=pl.Buffered(1))
        except (TypeError, ValueError):      # older JAX without pipeline_mode
            return pl.BlockSpec(shape, idx)

    w_spec = _const_spec((C, C))
    c_spec = _const_spec((C, 1))

    # TODO(synk): if two (C, C) weight sets overflow the VMEM budget even in
    # bf16 (~C > 2000 on v7x), add a third grid axis over C_in with an f32
    # VMEM accumulator ("arbitrary" axis, init/finalize via pl.when) instead of
    # letting the compiler shrink tile_l.
    return pl.pallas_call(
        functools.partial(_residue_kernel, mxu_dtype=mxu_dtype),
        out_shape=jax.ShapeDtypeStruct((N, C, L), act_dtype),
        grid_spec=pltpu.PrefetchScalarGridSpec(
            num_scalar_prefetch=0,
            grid=(N, n_l),
            in_specs=[x_spec,          # x slab
                      w_spec, c_spec,  # folded conv1+bn1
                      w_spec, c_spec], # folded conv2+bn2
            out_specs=x_spec,
        ),
        compiler_params=pltpu.CompilerParams(
            dimension_semantics=("parallel", "parallel"),
            vmem_limit_bytes=vmem_limit),
    )(x_ncl, w1f, c1, w2f, c2)


def make_params(key, C):
    ks = jax.random.split(key, 8)
    bound = 1.0 / jnp.sqrt(C)  # PyTorch Conv1d default init range
    w1 = jax.random.uniform(ks[0], (C, C), jnp.float32, -bound, bound)
    b1 = jax.random.uniform(ks[1], (C,), jnp.float32, -bound, bound)
    w2 = jax.random.uniform(ks[2], (C, C), jnp.float32, -bound, bound)
    b2 = jax.random.uniform(ks[3], (C,), jnp.float32, -bound, bound)
    # BatchNorm params / running stats (deterministic, non-trivial).
    g1 = 1.0 + 0.1 * jax.random.normal(ks[4], (C,), jnp.float32)
    be1 = 0.1 * jax.random.normal(ks[5], (C,), jnp.float32)
    rm1 = 0.05 * jax.random.normal(ks[6], (C,), jnp.float32)
    rv1 = 1.0 + 0.1 * jnp.abs(jax.random.normal(ks[7], (C,), jnp.float32))
    g2 = jnp.flip(g1)
    be2 = -be1
    rm2 = jnp.flip(rm1)
    rv2 = 1.0 + jnp.flip(rv1 - 1.0)
    return (w1, b1, g1, be1, rm1, rv1, w2, b2, g2, be2, rm2, rv2)


def _reference(x_ncl, params, eps=1e-5):
    """Pure-JAX reference of the PyTorch forward (eval-mode BN), NCL layout."""
    w1, b1, g1, be1, rm1, rv1, w2, b2, g2, be2, rm2, rv2 = params

    def conv_bn_relu(h, w, b, g, be, rm, rv):
        y = jnp.einsum('oc,ncl->nol', w, h) + b[None, :, None]
        y = ((y - rm[None, :, None]) / jnp.sqrt(rv[None, :, None] + eps)
             * g[None, :, None] + be[None, :, None])
        return jnp.maximum(y, 0.0)

    h = conv_bn_relu(x_ncl, w1, b1, g1, be1, rm1, rv1)
    h = conv_bn_relu(h, w2, b2, g2, be2, rm2, rv2)
    return x_ncl + h


if __name__ == "__main__":
    key = jax.random.PRNGKey(0)
    k_x, k_p = jax.random.split(key)

    N, C, L = 2, 4, 16                        # (batch, channels, length)
    x = jax.random.normal(k_x, (N, C, L), jnp.float32)
    params = make_params(k_p, C)
    ref = _reference(x, params)

    fwd = jax.jit(residue_module_forward)

    # f32 path (exact check).
    out = jax.block_until_ready(fwd(x, params))
    assert out.shape == (N, C, L)
    assert jnp.allclose(out, ref, atol=1e-5, rtol=1e-5), "f32 mismatch vs reference"

    # Ragged length + single batch: exercises the pad/slice-free tail handling
    # and the N==1 tile split that keeps both v7x TensorCores busy.
    N2, L2 = 1, 300
    x2 = jax.random.normal(k_x, (N2, C, L2), jnp.float32)
    ref2 = _reference(x2, params)
    out2 = jax.block_until_ready(fwd(x2, params))
    assert out2.shape == (N2, C, L2)
    assert jnp.allclose(out2, ref2, atol=1e-5, rtol=1e-5), "ragged-L mismatch vs reference"

    # bf16 activation streaming + bf16 MXU operands (elementwise math stays f32).
    fast = jax.jit(functools.partial(residue_module_forward,
                                     mxu_dtype=jnp.bfloat16,
                                     stream_dtype=jnp.bfloat16))
    out_bf16 = jax.block_until_ready(fast(x, params))
    assert out_bf16.shape == (N, C, L)
    assert jnp.allclose(out_bf16.astype(jnp.float32), ref, atol=1e-1, rtol=1e-1), \
        "bf16 mismatch vs reference"

    print("KERNEL_OK")
</pallas_src>

<mosaic_0001>
module attributes {stable_mosaic.version = 11 : i64} {
  func.func @_residue_kernel(%arg0: i32, %arg1: i32, %arg2: memref<1x4x16xf32, #tpu.memory_space<vmem>>, %arg3: memref<4x4xf32, #tpu.memory_space<vmem>>, %arg4: memref<4x1xf32, #tpu.memory_space<vmem>>, %arg5: memref<4x4xf32, #tpu.memory_space<vmem>>, %arg6: memref<4x1xf32, #tpu.memory_space<vmem>>, %arg7: memref<1x4x16xf32, #tpu.memory_space<vmem>>) attributes {dimension_semantics = [#tpu.dimension_semantics<parallel>, #tpu.dimension_semantics<parallel>], iteration_bounds = array<i64: 2, 1>, scalar_prefetch = 0 : i64, scratch_operands = 0 : i64, tpu.core_type = #tpu.core_type<tc>, window_params = [{transform_indices = @transform_0, window_bounds = array<i64: 1, 4, 16>}, {pipeline_mode = #tpu.pipeline_mode<synchronous>, transform_indices = @transform_1, window_bounds = array<i64: 4, 4>}, {pipeline_mode = #tpu.pipeline_mode<synchronous>, transform_indices = @transform_2, window_bounds = array<i64: 4, 1>}, {pipeline_mode = #tpu.pipeline_mode<synchronous>, transform_indices = @transform_3, window_bounds = array<i64: 4, 4>}, {pipeline_mode = #tpu.pipeline_mode<synchronous>, transform_indices = @transform_4, window_bounds = array<i64: 4, 1>}, {transform_indices = @transform_5, window_bounds = array<i64: 1, 4, 16>}]} {
    %c0 = arith.constant 0 : index
    %c0_0 = arith.constant 0 : index
    %c0_1 = arith.constant 0 : index
    %0 = vector.load %arg2[%c0, %c0_0, %c0_1] : memref<1x4x16xf32, #tpu.memory_space<vmem>>, vector<1x4x16xf32>
    %1 = vector.shape_cast %0 : vector<1x4x16xf32> to vector<4x16xf32>
    %c0_2 = arith.constant 0 : index
    %c0_3 = arith.constant 0 : index
    %2 = vector.load %arg3[%c0_2, %c0_3] : memref<4x4xf32, #tpu.memory_space<vmem>>, vector<4x4xf32>
    %cst = arith.constant dense<0.000000e+00> : vector<4x16xf32>
    %3 = tpu.matmul %2, %1, %cst {dimension_numbers = #tpu.dot_dimension_numbers<[1], [0], [0], [1], [0, 0, 1, 1], [], []>} : vector<4x4xf32>, vector<4x16xf32>, vector<4x16xf32> -> vector<4x16xf32>
    %c0_4 = arith.constant 0 : index
    %c0_5 = arith.constant 0 : index
    %4 = vector.load %arg4[%c0_4, %c0_5] : memref<4x1xf32, #tpu.memory_space<vmem>>, vector<4x1xf32>
    %5 = vector.broadcast %4 : vector<4x1xf32> to vector<4x16xf32>
    %6 = arith.addf %3, %5 : vector<4x16xf32>
    %cst_6 = arith.constant 0.000000e+00 : f32
    %7 = vector.broadcast %cst_6 : f32 to vector<4x16xf32>
    %8 = arith.maximumf %6, %7 : vector<4x16xf32>
    %c0_7 = arith.constant 0 : index
    %c0_8 = arith.constant 0 : index
    %9 = vector.load %arg5[%c0_7, %c0_8] : memref<4x4xf32, #tpu.memory_space<vmem>>, vector<4x4xf32>
    %cst_9 = arith.constant dense<0.000000e+00> : vector<4x16xf32>
    %10 = tpu.matmul %9, %8, %cst_9 {dimension_numbers = #tpu.dot_dimension_numbers<[1], [0], [0], [1], [0, 0, 1, 1], [], []>} : vector<4x4xf32>, vector<4x16xf32>, vector<4x16xf32> -> vector<4x16xf32>
    %c0_10 = arith.constant 0 : index
    %c0_11 = arith.constant 0 : index
    %11 = vector.load %arg6[%c0_10, %c0_11] : memref<4x1xf32, #tpu.memory_space<vmem>>, vector<4x1xf32>
    %12 = vector.broadcast %11 : vector<4x1xf32> to vector<4x16xf32>
    %13 = arith.addf %10, %12 : vector<4x16xf32>
    %cst_12 = arith.constant 0.000000e+00 : f32
    %14 = vector.broadcast %cst_12 : f32 to vector<4x16xf32>
    %15 = arith.maximumf %13, %14 : vector<4x16xf32>
    %16 = arith.addf %1, %15 : vector<4x16xf32>
    %c0_13 = arith.constant 0 : index
    %c0_14 = arith.constant 0 : index
    %c0_15 = arith.constant 0 : index
    %17 = vector.load %arg7[%c0_13, %c0_14, %c0_15] : memref<1x4x16xf32, #tpu.memory_space<vmem>>, vector<1x4x16xf32>
    %18 = vector.shape_cast %17 : vector<1x4x16xf32> to vector<4x16xf32>
    %19 = vector.shape_cast %16 : vector<4x16xf32> to vector<1x4x16xf32>
    tpu.vector_store %arg7[%c0_13, %c0_14, %c0_15], %19 {strides = array<i32>} : memref<1x4x16xf32, #tpu.memory_space<vmem>>, vector<1x4x16xf32>,
    return
  }
  func.func @transform_0(%arg0: i32, %arg1: i32) -> (i32, i32, i32) {
    %c0_i32 = arith.constant 0 : i32
    %c0_i32_0 = arith.constant 0 : i32
    return %arg0, %c0_i32, %arg1 : i32, i32, i32
  }
  func.func @transform_1(%arg0: i32, %arg1: i32) -> (i32, i32) {
    %c0_i32 = arith.constant 0 : i32
    %c0_i32_0 = arith.constant 0 : i32
    %c0_i32_1 = arith.constant 0 : i32
    return %c0_i32, %c0_i32_0 : i32, i32
  }
  func.func @transform_2(%arg0: i32, %arg1: i32) -> (i32, i32) {
    %c0_i32 = arith.constant 0 : i32
    %c0_i32_0 = arith.constant 0 : i32
    %c0_i32_1 = arith.constant 0 : i32
    return %c0_i32, %c0_i32_0 : i32, i32
  }
  func.func @transform_3(%arg0: i32, %arg1: i32) -> (i32, i32) {
    %c0_i32 = arith.constant 0 : i32
    %c0_i32_0 = arith.constant 0 : i32
    %c0_i32_1 = arith.constant 0 : i32
    return %c0_i32, %c0_i32_0 : i32, i32
  }
  func.func @transform_4(%arg0: i32, %arg1: i32) -> (i32, i32) {
    %c0_i32 = arith.constant 0 : i32
    %c0_i32_0 = arith.constant 0 : i32
    %c0_i32_1 = arith.constant 0 : i32
    return %c0_i32, %c0_i32_0 : i32, i32
  }
  func.func @transform_5(%arg0: i32, %arg1: i32) -> (i32, i32, i32) {
    %c0_i32 = arith.constant 0 : i32
    %c0_i32_0 = arith.constant 0 : i32
    return %arg0, %c0_i32, %arg1 : i32, i32, i32
  }
}

</mosaic_0001>

<llo_original>
// kernel: residue_module_forward.1
$region0: #{residue_module_forward.1}
  #allocation0 [shape = 'u32[]', space=smem, size = 0x4, offset = 0x4, fixed_abs, tag = 'smem constant byte address 0x4 - core index']
  #allocation1 [shape = 'u32[144,128]{1,0:T(1,128)}', space=vmem, size = 0x12000, scoped, tag = 'internal scratch']
  %s0 = inlined_call_operand.vmem [shape: f32[2,4,16], index: 0, kind: input, shape index: {}]
  %s1 = inlined_call_operand.vmem [shape: f32[4,4], index: 1, kind: input, shape index: {}]
  %s2 = inlined_call_operand.vmem [shape: f32[4,1], index: 2, kind: input, shape index: {}]
  %s3 = inlined_call_operand.vmem [shape: f32[4,4], index: 3, kind: input, shape index: {}]
  %s4 = inlined_call_operand.vmem [shape: f32[4,1], index: 4, kind: input, shape index: {}]
  %s5 = inlined_call_operand.hbm [shape: f32[2,4,16], index: 5, kind: output, shape index: {}]
  %s6 = sld [smem:[#allocation0]]
  $region53: #{residue_module_forward.1} parent=0
    _
  %s8 = ssub.s32 1, %s6
  %s9 = scalar_select 0, %s8, %s6
  $region1: #{residue_module_forward.1} parent=0
    #allocation2 [shape = 'u8[4096]{0}', space=vmem, size = 0x1000, scoped, tag = 'output window, operand 0']
    #allocation3 [shape = 's32[2]{0}', space=sflag, size = 0x8, scoped, tag = 'scoped memory for residue_module_forward.1']
    %10 = vsyncpa [#allocation3], 0
    %s11 = scalar_lea.sflag [#allocation3], 1
    %12 = vsyncpa %s11, 0
    loop: start=0, step=1, limit=4
    $region2: #{residue_module_forward.1} parent=1 // loop_pre_header
      _
    $region3: #{residue_module_forward.1} parent=1 // loop_header
      %s14 = sphi 0, %s18
      %p15 = scmp.ge.s32.totalorder %s14, 4
      %s21 = sphi 0, %s33
      %s22 = sphi 0, %s29
      %s23 = sphi 0, %s21
      %s24 = sphi 0, %s22
      %s25 = sphi 0, %s23
      %s26 = sphi 0, %s24
      %s38 = sphi 0, %s40
      %s41 = sphi 0, %s38
      %s42 = sphi 0, %s41
      %s58 = sphi 0, %s42
      %s62 = sphi 0, %s62
      %s64 = sphi 0, %s62
      %s65 = sphi 0, %s64
      %s79 = sphi 0, %s65
      %s83 = sphi 0, %s83
      %s85 = sphi 0, %s83
      %s86 = sphi 0, %s85
      %s100 = sphi 0, %s86
      %s104 = sphi 0, %s104
      %s106 = sphi 0, %s104
      %s107 = sphi 0, %s106
      %s121 = sphi 0, %s107
      %s125 = sphi 0, %s125
      %s127 = sphi 0, %s125
      %s128 = sphi 0, %s127
      %s142 = sphi 0, %s128
      %s150 = sphi 0, %s152
      %s153 = sphi 0, %s150
      %s154 = sphi 0, %s153
      %s170 = sphi 0, %s154
    $region4: #{residue_module_forward.1} parent=1 // loop_header_branch
      %17 = sbr.rel (%p15) target = $region8
    $region5: #{residue_module_forward.1} parent=1 // loop_body
      %s19 = ssub.s32 %s14, 1
      %s20 = ssub.s32 %s14, 2
      %s27 = sadd.s32 1, %s22
      %p28 = scmp.ge.s32.totalorder %s27, 1
      %s29 = scalar_select %p28, 0, %s27
      %s30 = sadd.s32 1, %s21
      %s31 = scalar_select %p28, %s30, %s21
      %p32 = scmp.ge.s32.totalorder %s31, 2
      %s33 = scalar_select %p32, 0, %s31
      %s34 = ssub.s32 %s21, %s33
      %s35 = ssub.s32 %s22, %s29
      %s36 = sor.u32 %s34, %s35
      %p37 = scmp.eq.s32.totalorder %s36, 0
      %s39 = sadd.s32 %s38, 1
      %s40 = scalar_select %p37, %s38, %s39
      %p43 = pneg %p37
      %p44 = scmp.eq.s32.totalorder %s14, 1
      %p45 = por %p43, %p44
      %p46 = scmp.ne.s32.totalorder %s38, %s41
      %p47 = scmp.eq.s32.totalorder %s14, 0
      %p48 = por %p46, %p47
      %p49 = scmp.ne.s32.totalorder %s38, %s41
      %p50 = scmp.eq.s32.totalorder %s19, 1
      %p51 = por %p49, %p50
      %p52 = scmp.ne.s32.totalorder %s41, %s42
      %p53 = scmp.eq.s32.totalorder %s19, 0
      %p54 = por %p52, %p53
      %p55 = scmp.ne.s32.totalorder %s41, %s42
      %p56 = scmp.eq.s32.totalorder %s20, 1
      %p57 = por %p55, %p56
      %p59 = scmp.ne.s32.totalorder %s42, %s58
      %p60 = scmp.eq.s32.totalorder %s20, 0
      %p61 = por %p59, %p60
      %s63 = sadd.s32 %s62, 1
      %p66 = scmp.eq.s32.totalorder %s14, 1
      %p67 = scmp.ne.s32.totalorder %s62, %s64
      %p68 = scmp.eq.s32.totalorder %s14, 0
      %p69 = por %p67, %p68
      %p70 = scmp.ne.s32.totalorder %s62, %s64
      %p71 = scmp.eq.s32.totalorder %s19, 1
      %p72 = por %p70, %p71
      %p73 = scmp.ne.s32.totalorder %s64, %s65
      %p74 = scmp.eq.s32.totalorder %s19, 0
      %p75 = por %p73, %p74
      %p76 = scmp.ne.s32.totalorder %s64, %s65
      %p77 = scmp.eq.s32.totalorder %s20, 1
      %p78 = por %p76, %p77
      %p80 = scmp.ne.s32.totalorder %s65, %s79
      %p81 = scmp.eq.s32.totalorder %s20, 0
      %p82 = por %p80, %p81
      %s84 = sadd.s32 %s83, 1
      %p87 = scmp.eq.s32.totalorder %s14, 1
      %p88 = scmp.ne.s32.totalorder %s83, %s85
      %p89 = scmp.eq.s32.totalorder %s14, 0
      %p90 = por %p88, %p89
      %p91 = scmp.ne.s32.totalorder %s83, %s85
      %p92 = scmp.eq.s32.totalorder %s19, 1
      %p93 = por %p91, %p92
      %p94 = scmp.ne.s32.totalorder %s85, %s86
      %p95 = scmp.eq.s32.totalorder %s19, 0
      %p96 = por %p94, %p95
      %p97 = scmp.ne.s32.totalorder %s85, %s86
      %p98 = scmp.eq.s32.totalorder %s20, 1
      %p99 = por %p97, %p98
      %p101 = scmp.ne.s32.totalorder %s86, %s100
      %p102 = scmp.eq.s32.totalorder %s20, 0
      %p103 = por %p101, %p102
      %s105 = sadd.s32 %s104, 1
      %p108 = scmp.eq.s32.totalorder %s14, 1
      %p109 = scmp.ne.s32.totalorder %s104, %s106
      %p110 = scmp.eq.s32.totalorder %s14, 0
      %p111 = por %p109, %p110
      %p112 = scmp.ne.s32.totalorder %s104, %s106
      %p113 = scmp.eq.s32.totalorder %s19, 1
      %p114 = por %p112, %p113
      %p115 = scmp.ne.s32.totalorder %s106, %s107
      %p116 = scmp.eq.s32.totalorder %s19, 0
      %p117 = por %p115, %p116
      %p118 = scmp.ne.s32.totalorder %s106, %s107
      %p119 = scmp.eq.s32.totalorder %s20, 1
      %p120 = por %p118, %p119
      %p122 = scmp.ne.s32.totalorder %s107, %s121
      %p123 = scmp.eq.s32.totalorder %s20, 0
      %p124 = por %p122, %p123
      %s126 = sadd.s32 %s125, 1
      %p129 = scmp.eq.s32.totalorder %s14, 1
      %p130 = scmp.ne.s32.totalorder %s125, %s127
      %p131 = scmp.eq.s32.totalorder %s14, 0
      %p132 = por %p130, %p131
      %p133 = scmp.ne.s32.totalorder %s125, %s127
      %p134 = scmp.eq.s32.totalorder %s19, 1
      %p135 = por %p133, %p134
      %p136 = scmp.ne.s32.totalorder %s127, %s128
      %p137 = scmp.eq.s32.totalorder %s19, 0
      %p138 = por %p136, %p137
      %p139 = scmp.ne.s32.totalorder %s127, %s128
      %p140 = scmp.eq.s32.totalorder %s20, 1
      %p141 = por %p139, %p140
      %p143 = scmp.ne.s32.totalorder %s128, %s142
      %p144 = scmp.eq.s32.totalorder %s20, 0
      %p145 = por %p143, %p144
      %s146 = ssub.s32 %s21, %s33
      %s147 = ssub.s32 %s22, %s29
      %s148 = sor.u32 %s146, %s147
      %p149 = scmp.eq.s32.totalorder %s148, 0
      %s151 = sadd.s32 %s150, 1
      %s152 = scalar_select %p149, %s150, %s151
      %p155 = pneg %p149
      %p156 = scmp.eq.s32.totalorder %s14, 1
      %p157 = por %p155, %p156
      %p158 = scmp.ne.s32.totalorder %s150, %s153
      %p159 = scmp.eq.s32.totalorder %s14, 0
      %p160 = por %p158, %p159
      %p161 = scmp.ne.s32.totalorder %s150, %s153
      %p162 = scmp.eq.s32.totalorder %s19, 1
      %p163 = por %p161, %p162
      %p164 = scmp.ne.s32.totalorder %s153, %s154
      %p165 = scmp.eq.s32.totalorder %s19, 0
      %p166 = por %p164, %p165
      %p167 = scmp.ne.s32.totalorder %s153, %s154
      %p168 = scmp.eq.s32.totalorder %s20, 1
      %p169 = por %p167, %p168
      %p171 = scmp.ne.s32.totalorder %s154, %s170
      %p172 = scmp.eq.s32.totalorder %s20, 0
      %p173 = por %p171, %p172
      %p174 = scmp.le.s32.totalorder 1, %s14
      %p175 = scmp.lt.s32.totalorder %s14, 3
      %p176 = pnand %p174, %p175
      %p177 = pneg %p176
      // Predicated region
      $region9: #{residue_module_forward.1} parent=5 // pred_check
        _
      $region10: #{residue_module_forward.1} parent=5 // pred_check_branch
        %179 = sbr.rel (%p176) target = $region12
      $region11: #{residue_module_forward.1} parent=5 // pred_region
        %s180 = ssub.s32 %s14, 1
        // Predicated region
        $region13: #{residue_module_forward.1} parent=11 // pred_check
          %p181 = pneg %p75
        $region14: #{residue_module_forward.1} parent=11 // pred_check_branch
          %183 = sbr.rel (%p181) target = $region16
        $region15: #{residue_module_forward.1} parent=11 // pred_region
          _
        $region16: #{residue_module_forward.1} parent=11 // pred_fallthru
          _
        // Predicated region
        $region17: #{residue_module_forward.1} parent=11 // pred_check
          %p184 = pneg %p96
        $region18: #{residue_module_forward.1} parent=11 // pred_check_branch
          %186 = sbr.rel (%p184) target = $region20
        $region19: #{residue_module_forward.1} parent=11 // pred_region
          _
        $region20: #{residue_module_forward.1} parent=11 // pred_fallthru
          _
        // Predicated region
        $region21: #{residue_module_forward.1} parent=11 // pred_check
          %p187 = pneg %p117
        $region22: #{residue_module_forward.1} parent=11 // pred_check_branch
          %189 = sbr.rel (%p187) target = $region24
        $region23: #{residue_module_forward.1} parent=11 // pred_region
          _
        $region24: #{residue_module_forward.1} parent=11 // pred_fallthru
          _
        // Predicated region
        $region25: #{residue_module_forward.1} parent=11 // pred_check
          %p190 = pneg %p138
        $region26: #{residue_module_forward.1} parent=11 // pred_check_branch
          %192 = sbr.rel (%p190) target = $region28
        $region27: #{residue_module_forward.1} parent=11 // pred_region
          _
        $region28: #{residue_module_forward.1} parent=11 // pred_fallthru
          _
      $region12: #{residue_module_forward.1} parent=5 // pred_fallthru
        _
      %p193 = scmp.lt.s32.totalorder %s14, 2
      // Predicated region
      $region29: #{residue_module_forward.1} parent=5 // pred_check
        %p194 = pneg %p193
      $region30: #{residue_module_forward.1} parent=5 // pred_check_branch
        %196 = sbr.rel (%p194) target = $region32
      $region31: #{residue_module_forward.1} parent=5 // pred_region
        // Predicated region
        $region33: #{residue_module_forward.1} parent=31 // pred_check
          %p197 = pneg %p48
        $region34: #{residue_module_forward.1} parent=31 // pred_check_branch
          %199 = sbr.rel (%p197) target = $region36
        $region35: #{residue_module_forward.1} parent=31 // pred_region
          %p200 = scmp.lt.s32.totalorder %s21, 1
          %s201 = scalar_select %p200, %s21, 1
          %p202 = scmp.lt.s32.totalorder %s22, 0
          %s203 = scalar_select %p202, %s22, 0
          %s204 = sadd.s32 %s203, %s201
          %s205 = smul.addr %s204, 4
          %s206 = scalar_lea.vmem %s0, %s205
        $region36: #{residue_module_forward.1} parent=31 // pred_fallthru
          _
      $region32: #{residue_module_forward.1} parent=5 // pred_fallthru
        _
      %p207 = scmp.le.s32.totalorder 1, %s14
      %p208 = scmp.lt.s32.totalorder %s14, 3
      %p209 = pnand %p207, %p208
      %p210 = pneg %p209
      // Predicated region
      $region37: #{residue_module_forward.1} parent=5 // pred_check
        _
      $region38: #{residue_module_forward.1} parent=5 // pred_check_branch
        %212 = sbr.rel (%p209) target = $region40
      $region39: #{residue_module_forward.1} parent=5 // pred_region
        %s213 = ssub.s32 %s14, 1
        %p214 = scmp.lt.s32.totalorder %s23, 1
        %s215 = scalar_select %p214, %s23, 1
        %p216 = scmp.lt.s32.totalorder %s24, 0
        %s217 = scalar_select %p216, %s24, 0
        %s218 = sadd.s32 %s217, %s215
        %s219 = smul.addr %s218, 4
        %s220 = scalar_lea.vmem %s0, %s219
        %p221 = pneg %p54
        %p222 = pneg %p51
        %p223 = pneg %p75
        %p224 = pneg %p72
        %p225 = pneg %p96
        %p226 = pneg %p93
        %p227 = pneg %p117
        %p228 = pneg %p114
        %p229 = pneg %p138
        %p230 = pneg %p135
        %p231 = pneg %p166
        %p232 = pneg %p163
        %s233 = sand.u32 %s153, 1
        %s234 = scalar_lea.sflag [#allocation3], %s233
        %s235 = sand.u32 %s153, 1
        %s236 = smul.addr %s235, 4
        %s237 = scalar_lea.vmem [#allocation2], %s236
        %p238 = scmp.lt.s32.totalorder %s23, 1
        %s239 = scalar_select %p238, %s23, 1
        %p240 = scmp.lt.s32.totalorder %s24, 0
        %s241 = scalar_select %p240, %s24, 0
        %s242 = sadd.s32 %s241, %s239
        %s243 = smul.addr %s242, 4
        %s244 = scalar_lea.vmem %s0, %s243
        %v245 = vld [vmem:[%s244] sm:$0xf]
        %v246 = vld [vmem:[%s1] sm:$0xf]
        %v247 = vld [vmem:[%s2] sm:$0xf]
        %249 = vset.pattern.permute.xlu0 0
        %250 = vperm.xlu0 %249, %v247
        %v251 = vpop.permute.xlu0 %250
        %vm253 = vcmask 31744
        %v255 = vsel %vm253, %v246, 0
        %vm257 = vcmask 1043456
        %v259 = vsel %vm257, %v245, 0
        %261 = vmatprep.subr.mxu0 0.0
        %262 = vmatpush1.msra.mxu0 0.0
        %263 = vmatprep.subr.mxu0 0.0
        %264 = vmatpush1.msra.mxu0 0.0
        %265 = vmatprep.subr.mxu0 0.0
        %266 = vmatpush1.msra.mxu0 0.0
        %267 = vmatprep.subr.mxu0 0.0
        %268 = vmatpush1.msra.mxu0 0.0
        %269 = vmatprep.subr.mxu0 0.0
        %270 = vmatpush1.msra.mxu0 0.0
        %271 = vmatprep.subr.mxu0 0.0
        %272 = vmatpush1.msra.mxu0 0.0
        %273 = vmatprep.subr.mxu0 0.0
        %274 = vmatpush1.msra.mxu0 0.0
        %275 = vmatprep.subr.mxu0 0.0
        %276 = vmatpush1.msra.mxu0 0.0
        %277 = vmatprep.subr.mxu0 0.0
        %278 = vmatpush1.msra.mxu0 0.0
        %279 = vmatprep.subr.mxu0 0.0
        %280 = vmatpush1.msra.mxu0 0.0
        %281 = vmatprep.subr.mxu0 0.0
        %282 = vmatpush1.msra.mxu0 0.0
        %283 = vmatprep.subr.mxu0 0.0
        %284 = vmatpush1.msra.mxu0 0.0
        %285 = vmatprep.subr.mxu0 0.0
        %286 = vmatpush1.msra.mxu0 0.0
        %287 = vmatprep.subr.mxu0 0.0
        %288 = vmatpush1.msra.mxu0 0.0
        %289 = vmatprep.subr.mxu0 0.0
        %290 = vmatpush1.msra.mxu0 0.0
        %291 = vmatprep.subr.mxu0 0.0
        %292 = vmatpush1.msra.mxu0 %v259
        %293 = vmatprep.subr.mxu0 0.0
        %294 = vmatpush2.msra.mxu0 0.0
        %295 = vmatprep.subr.mxu0 0.0
        %296 = vmatpush2.msra.mxu0 0.0
        %297 = vmatprep.subr.mxu0 0.0
        %298 = vmatpush2.msra.mxu0 0.0
        %299 = vmatprep.subr.mxu0 0.0
        %300 = vmatpush2.msra.mxu0 0.0
        %301 = vmatprep.subr.mxu0 0.0
        %302 = vmatpush2.msra.mxu0 0.0
        %303 = vmatprep.subr.mxu0 0.0
        %304 = vmatpush2.msra.mxu0 0.0
        %305 = vmatprep.subr.mxu0 0.0
        %306 = vmatpush2.msra.mxu0 0.0
        %307 = vmatprep.subr.mxu0 0.0
        %308 = vmatpush2.msra.mxu0 0.0
        %309 = vmatprep.subr.mxu0 0.0
        %310 = vmatpush2.msra.mxu0 0.0
        %311 = vmatprep.subr.mxu0 0.0
        %312 = vmatpush2.msra.mxu0 0.0
        %313 = vmatprep.subr.mxu0 0.0
        %314 = vmatpush2.msra.mxu0 0.0
        %315 = vmatprep.subr.mxu0 0.0
        %316 = vmatpush2.msra.mxu0 0.0
        %317 = vmatprep.subr.mxu0 0.0
        %318 = vmatpush2.msra.mxu0 0.0
        %319 = vmatprep.subr.mxu0 0.0
        %320 = vmatpush2.msra.mxu0 0.0
        %321 = vmatprep.subr.mxu0 0.0
        %322 = vmatpush2.msra.mxu0 0.0
        %323 = vmatprep.subr.mxu0 0.0
        %324 = vmatpush2.msra.mxu0 0.0
        %325 = vmatprep.mubr.f32.mxu0 0.0
        %326 = vmatmul.mubr.f32.gmra.mxu0 %v255
        %v327 = vpop.f32.mrf.mxu0
        %v328 = vadd.f32 %v251, %v327
        %v329 = vpop.f32.mrf.mxu0
        %330 = vdwg.mxu0
        %v331 = vmax.f32 %v328, 0.0
        %v332 = vld [vmem:[%s3] sm:$0xf]
        %v333 = vld [vmem:[%s4] sm:$0xf]
        %335 = vset.pattern.permute.xlu0 0
        %336 = vperm.xlu0 %335, %v333
        %v337 = vpop.permute.xlu0 %336
        %v340 = vsel %vm253, %v332, 0
        %v343 = vsel %vm257, %v331, 0
        %345 = vmatprep.subr.mxu0 0.0
        %346 = vmatpush1.msra.mxu0 0.0
        %347 = vmatprep.subr.mxu0 0.0
        %348 = vmatpush1.msra.mxu0 0.0
        %349 = vmatprep.subr.mxu0 0.0
        %350 = vmatpush1.msra.mxu0 0.0
        %351 = vmatprep.subr.mxu0 0.0
        %352 = vmatpush1.msra.mxu0 0.0
        %353 = vmatprep.subr.mxu0 0.0
        %354 = vmatpush1.msra.mxu0 0.0
        %355 = vmatprep.subr.mxu0 0.0
        %356 = vmatpush1.msra.mxu0 0.0
        %357 = vmatprep.subr.mxu0 0.0
        %358 = vmatpush1.msra.mxu0 0.0
        %359 = vmatprep.subr.mxu0 0.0
        %360 = vmatpush1.msra.mxu0 0.0
        %361 = vmatprep.subr.mxu0 0.0
        %362 = vmatpush1.msra.mxu0 0.0
        %363 = vmatprep.subr.mxu0 0.0
        %364 = vmatpush1.msra.mxu0 0.0
        %365 = vmatprep.subr.mxu0 0.0
        %366 = vmatpush1.msra.mxu0 0.0
        %367 = vmatprep.subr.mxu0 0.0
        %368 = vmatpush1.msra.mxu0 0.0
        %369 = vmatprep.subr.mxu0 0.0
        %370 = vmatpush1.msra.mxu0 0.0
        %371 = vmatprep.subr.mxu0 0.0
        %372 = vmatpush1.msra.mxu0 0.0
        %373 = vmatprep.subr.mxu0 0.0
        %374 = vmatpush1.msra.mxu0 0.0
        %375 = vmatprep.subr.mxu0 0.0
        %376 = vmatpush1.msra.mxu0 %v343
        %377 = vmatprep.subr.mxu0 0.0
        %378 = vmatpush2.msra.mxu0 0.0
        %379 = vmatprep.subr.mxu0 0.0
        %380 = vmatpush2.msra.mxu0 0.0
        %381 = vmatprep.subr.mxu0 0.0
        %382 = vmatpush2.msra.mxu0 0.0
        %383 = vmatprep.subr.mxu0 0.0
        %384 = vmatpush2.msra.mxu0 0.0
        %385 = vmatprep.subr.mxu0 0.0
        %386 = vmatpush2.msra.mxu0 0.0
        %387 = vmatprep.subr.mxu0 0.0
        %388 = vmatpush2.msra.mxu0 0.0
        %389 = vmatprep.subr.mxu0 0.0
        %390 = vmatpush2.msra.mxu0 0.0
        %391 = vmatprep.subr.mxu0 0.0
        %392 = vmatpush2.msra.mxu0 0.0
        %393 = vmatprep.subr.mxu0 0.0
        %394 = vmatpush2.msra.mxu0 0.0
        %395 = vmatprep.subr.mxu0 0.0
        %396 = vmatpush2.msra.mxu0 0.0
        %397 = vmatprep.subr.mxu0 0.0
        %398 = vmatpush2.msra.mxu0 0.0
        %399 = vmatprep.subr.mxu0 0.0
        %400 = vmatpush2.msra.mxu0 0.0
        %401 = vmatprep.subr.mxu0 0.0
        %402 = vmatpush2.msra.mxu0 0.0
        %403 = vmatprep.subr.mxu0 0.0
        %404 = vmatpush2.msra.mxu0 0.0
        %405 = vmatprep.subr.mxu0 0.0
        %406 = vmatpush2.msra.mxu0 0.0
        %407 = vmatprep.subr.mxu0 0.0
        %408 = vmatpush2.msra.mxu0 0.0
        %409 = vmatprep.mubr.f32.mxu0 0.0
        %410 = vmatmul.mubr.f32.gmra.mxu0 %v340
        %v411 = vpop.f32.mrf.mxu0
        %v412 = vadd.f32 %v337, %v411
        %v413 = vpop.f32.mrf.mxu0
        %414 = vdwg.mxu0
        %v415 = vmax.f32 %v412, 0.0
        %v416 = vadd.f32 %v245, %v415
        %vm417 = vcmask 125952
        %418 = vst.msk [vmem:[%s237] sm:$0xf] %vm417, %v416
        %s419 = sand.u32 %s153, 1
        %s420 = scalar_lea.sflag [#allocation3], %s419
        %s421 = sand.u32 %s153, 1
        %s422 = smul.addr %s421, 4
        %s423 = scalar_lea.vmem [#allocation2], %s422
        // Predicated region
        $region41: #{residue_module_forward.1} parent=39 // pred_check
          %p424 = pneg %p163
        $region42: #{residue_module_forward.1} parent=39 // pred_check_branch
          %426 = sbr.rel (%p424) target = $region44
        $region43: #{residue_module_forward.1} parent=39 // pred_region
          %s428 = ssub.s32 64, 64
          %429 = vsyncadd %s420, %s428
          %s430 = sadd.s32 %s24, %s23
          %s431 = smul.addr %s430, 64
          %s432 = scalar_lea.hbm %s5, %s431
          %s434 = sshll.u32 %s423, 4
          %s435 = int_to_ptr.vmem [resolvable:$true] %s434
          %437 = dma.vmem_to_hbm [thread:$0]  %s435, 64, %s432, %s420
        $region44: #{residue_module_forward.1} parent=39 // pred_fallthru
          _
      $region40: #{residue_module_forward.1} parent=5 // pred_fallthru
        _
      %p438 = scmp.le.s32.totalorder 2, %s14
      // Predicated region
      $region45: #{residue_module_forward.1} parent=5 // pred_check
        %p439 = pneg %p438
      $region46: #{residue_module_forward.1} parent=5 // pred_check_branch
        %441 = sbr.rel (%p439) target = $region48
      $region47: #{residue_module_forward.1} parent=5 // pred_region
        %s442 = ssub.s32 %s14, 2
        // Predicated region
        $region49: #{residue_module_forward.1} parent=47 // pred_check
          %p443 = pneg %p169
        $region50: #{residue_module_forward.1} parent=47 // pred_check_branch
          %445 = sbr.rel (%p443) target = $region52
        $region51: #{residue_module_forward.1} parent=47 // pred_region
          %s446 = sand.u32 %s154, 1
          %s447 = scalar_lea.sflag [#allocation3], %s446
          %s448 = sand.u32 %s154, 1
          %s449 = smul.addr %s448, 4
          %s450 = scalar_lea.vmem [#allocation2], %s449
          %451 = dma.done %s447, 64
        $region52: #{residue_module_forward.1} parent=47 // pred_fallthru
          _
      $region48: #{residue_module_forward.1} parent=5 // pred_fallthru
        _
    $region6: #{residue_module_forward.1} parent=1 // loop_footer
      %s18 = sadd.s32 1, %s14
    $region7: #{residue_module_forward.1} parent=1 // loop_footer_branch
      %13 = sbr.rel target = $region3
    $region8: #{residue_module_forward.1} parent=1 // loop_exit
      _
    %452 = vsyncpa [#allocation3], 1
    %s453 = scalar_lea.sflag [#allocation3], 1
    %454 = vsyncpa %s453, 1

</llo_original>
